<compile_context>
chip_gen: v5e
topology: v5e:2x2
jax: 0.10.0
libtpu: 0.0.40
codegen_flags: <defaults>
</compile_context>

<pallas_src>
import functools

import jax
import jax.numpy as jnp
from jax.experimental import pallas as pl
from jax.experimental.pallas import tpu as pltpu


def conv_prelu_cam_kernel(x_ref, wf_ref, bconv_ref, pw_ref, w1t_ref, b1_ref,
                          w2_ref, b2_ref, alphas_ref, o_ref, *, wp):
    # x_ref:      (1, C, (H+3)*(W+2)) bf16 zero-padded flat raster (CHW order)
    # wf_ref:     (C, 9*C)            bf16 fused conv weight, K order (ky,kx,ci)
    # bconv_ref:  (C, 1)   f32
    # pw_ref:     (1, M)   f32  pooling weights: 1/(H*W) on valid raster cols
    # w1t_ref:    (C, Hd)  f32  CAM Linear1 weight, transposed
    # b1_ref:     (1, Hd)  f32
    # w2_ref:     (C, Hd)  f32  CAM Linear2 weight (PyTorch layout)
    # b2_ref:     (C, 1)   f32
    # alphas_ref: SMEM (2,) f32 [PReLU after conv, PReLU inside CAM MLP]
    # o_ref:      (1, C, M) f32 with M = H*(W+2); wrapper drops the 2 pad cols
    C = o_ref.shape[1]
    M = o_ref.shape[2]

    # ---- im2col along K: 9 lane-shifted views, sublane-concatenated --------
    xT = x_ref[0]                                   # (C, cols) bf16
    taps = []
    for ky in range(3):
        for kx in range(3):
            off = ky * wp + kx
            taps.append(xT[:, off:off + M])         # (C, M) lane slice
    patch = jnp.concatenate(taps, axis=0)           # (9C, M) bf16

    # ---- 3x3 conv as a single fused-K MXU matmul, f32 accumulation ---------
    acc = jnp.dot(wf_ref[...], patch,
                  preferred_element_type=jnp.float32)       # (C, M) f32

    # ---- bias + PReLU (lane-dense, f32) -------------------------------------
    a1 = alphas_ref[0]
    y = acc + bconv_ref[...]
    y = jnp.where(y >= 0, y, a1 * y)

    # ---- CAM: masked global average pool (pad columns excluded) ------------
    pooled = jnp.sum(y * pw_ref[...], axis=1, keepdims=True)        # (C, 1)

    # ---- squeeze/excite MLP on the VPU (C -> C//16 -> C) --------------------
    a2 = alphas_ref[1]
    h = jnp.sum(w1t_ref[...] * pooled, axis=0, keepdims=True) + b1_ref[...]  # (1, Hd)
    h = jnp.where(h >= 0, h, a2 * h)
    s = jnp.sum(w2_ref[...] * h, axis=1, keepdims=True) + b2_ref[...]        # (C, 1)
    gain = 1.0 + jax.nn.sigmoid(s)                  # y*sigmoid(s) + y = y*(1+sigmoid)

    # ---- scale + residual, lane-dense store ---------------------------------
    o_ref[0] = (y * gain).astype(o_ref.dtype)


def conv_prelu_cam(x_nchw, params):
    """ConvPReluCAM forward. x_nchw: (B, C, H, W) float32 -> (B, C, H, W)."""
    B, C, H, W = x_nchw.shape
    Hd = params["w1"].shape[0]
    wp = W + 2                       # padded raster width
    M = H * wp                       # GEMM N dim / output raster length
    cols = (H + 3) * wp              # 1 top halo + 1 bottom halo + 1 extra row
                                     # so every im2col lane-slice stays in bounds

    # Zero halo + flatten to a per-channel raster; NCHW kept (no transposes),
    # the reshape is free. bf16 halves the input DMA bytes.
    x_flat = jnp.pad(x_nchw, ((0, 0), (0, 0), (1, 2), (1, 1)))
    x_flat = x_flat.reshape(B, C, cols).astype(jnp.bfloat16)

    # Fused conv weight: (co, ci, ky, kx) -> (co, ky, kx, ci) -> (C, 9C), bf16.
    wf = jnp.transpose(params["conv_w"], (0, 2, 3, 1)).reshape(C, 9 * C)
    wf = wf.astype(jnp.bfloat16)
    bconv = params["conv_b"].reshape(C, 1).astype(jnp.float32)
    # Pooling weights: 1/(H*W) on valid raster columns, 0 on the 2 pad columns.
    pw = ((jnp.arange(M) % wp) < W).astype(jnp.float32).reshape(1, M) / (H * W)
    w1t = params["w1"].T.astype(jnp.float32)            # (C, Hd)
    b1 = params["b1"].reshape(1, Hd).astype(jnp.float32)
    w2 = params["w2"].astype(jnp.float32)                # (C, Hd)
    b2 = params["b2"].reshape(C, 1).astype(jnp.float32)
    alphas = jnp.stack([params["alpha1"], params["alpha2"]]).astype(jnp.float32)

    out_flat = pl.pallas_call(
        functools.partial(conv_prelu_cam_kernel, wp=wp),
        out_shape=jax.ShapeDtypeStruct((B, C, M), jnp.float32),
        grid=(B,),
        in_specs=[
            pl.BlockSpec((1, C, cols), lambda b: (b, 0, 0)),
            pl.BlockSpec((C, 9 * C), lambda b: (0, 0)),
            pl.BlockSpec((C, 1), lambda b: (0, 0)),
            pl.BlockSpec((1, M), lambda b: (0, 0)),
            pl.BlockSpec((C, Hd), lambda b: (0, 0)),
            pl.BlockSpec((1, Hd), lambda b: (0, 0)),
            pl.BlockSpec((C, Hd), lambda b: (0, 0)),
            pl.BlockSpec((C, 1), lambda b: (0, 0)),
            pl.BlockSpec(memory_space=pltpu.MemorySpace.SMEM),
        ],
        out_specs=pl.BlockSpec((1, C, M), lambda b: (b, 0, 0)),
        compiler_params=pltpu.CompilerParams(
            dimension_semantics=("parallel",)),
    )(x_flat, wf, bconv, pw, w1t, b1, w2, b2, alphas)

    # Drop the 2 junk raster columns per row; output stays NCHW.
    return out_flat.reshape(B, C, H, wp)[:, :, :, :W]


def reference_forward(x_nchw, params, *, conv_dtype=jnp.float32):
    """Pure-JAX reference mirroring the PyTorch module (NCHW)."""
    y = jax.lax.conv_general_dilated(
        x_nchw.astype(conv_dtype), params["conv_w"].astype(conv_dtype),
        window_strides=(1, 1), padding=((1, 1), (1, 1)),
        dimension_numbers=("NCHW", "OIHW", "NCHW"),
        preferred_element_type=jnp.float32,
        precision=jax.lax.Precision.HIGHEST)
    y = y + params["conv_b"][None, :, None, None]
    y = jnp.where(y >= 0, y, params["alpha1"] * y)
    pooled = jnp.mean(y, axis=(2, 3))                                 # (B, C)
    h = jnp.matmul(pooled, params["w1"].T,
                   precision=jax.lax.Precision.HIGHEST) + params["b1"]
    h = jnp.where(h >= 0, h, params["alpha2"] * h)
    s = jax.nn.sigmoid(jnp.matmul(h, params["w2"].T,
                                  precision=jax.lax.Precision.HIGHEST)
                       + params["b2"])
    return y * s[:, :, None, None] + y


def init_params(key, num_feat, squeeze_factor=16):
    hd = num_feat // squeeze_factor
    k = jax.random.split(key, 6)
    return {
        "conv_w": 0.1 * jax.random.normal(k[0], (num_feat, num_feat, 3, 3), jnp.float32),
        "conv_b": 0.1 * jax.random.normal(k[1], (num_feat,), jnp.float32),
        "alpha1": jnp.float32(0.25),                                  # PReLU default
        "w1": 0.1 * jax.random.normal(k[2], (hd, num_feat), jnp.float32),
        "b1": 0.1 * jax.random.normal(k[3], (hd,), jnp.float32),
        "alpha2": jnp.float32(0.25),                                  # PReLU default
        "w2": 0.1 * jax.random.normal(k[4], (num_feat, hd), jnp.float32),
        "b2": 0.1 * jax.random.normal(k[5], (num_feat,), jnp.float32),
    }


if __name__ == "__main__":
    B, C, H, W = 2, 32, 16, 16          # num_feat=32 -> CAM hidden dim = 2
    key = jax.random.PRNGKey(0)
    kx, kp = jax.random.split(key)
    x = jax.random.normal(kx, (B, C, H, W), jnp.float32)
    params = init_params(kp, C)

    out = conv_prelu_cam(x, params)
    out = jax.block_until_ready(out)
    assert out.shape == (B, C, H, W)

    # Tight check vs. a reference matching the kernel's bf16-operand /
    # f32-accumulate conv numerics, plus a loose check vs. the pure-f32 ref.
    ref_bf16 = reference_forward(x, params, conv_dtype=jnp.bfloat16)
    ref_f32 = reference_forward(x, params, conv_dtype=jnp.float32)
    err_tight = float(jnp.max(jnp.abs(out - ref_bf16)))
    err_loose = float(jnp.max(jnp.abs(out - ref_f32)))
    assert err_tight < 5e-3, f"mismatch vs bf16-matched reference: {err_tight}"
    assert err_loose < 1e-1, f"mismatch vs f32 reference: {err_loose}"

    print("KERNEL_OK")
</pallas_src>

<mosaic_0001>
module attributes {stable_mosaic.version = 11 : i64} {
  func.func @conv_prelu_cam_kernel(%arg0: i32, %arg1: memref<1x32x342xbf16, #tpu.memory_space<vmem>>, %arg2: memref<32x288xbf16, #tpu.memory_space<vmem>>, %arg3: memref<32x1xf32, #tpu.memory_space<vmem>>, %arg4: memref<1x288xf32, #tpu.memory_space<vmem>>, %arg5: memref<32x2xf32, #tpu.memory_space<vmem>>, %arg6: memref<1x2xf32, #tpu.memory_space<vmem>>, %arg7: memref<32x2xf32, #tpu.memory_space<vmem>>, %arg8: memref<32x1xf32, #tpu.memory_space<vmem>>, %arg9: memref<2xf32, #tpu.memory_space<smem>>, %arg10: memref<1x32x288xf32, #tpu.memory_space<vmem>>) attributes {dimension_semantics = [#tpu.dimension_semantics<parallel>], iteration_bounds = array<i64: 2>, scalar_prefetch = 0 : i64, scratch_operands = 0 : i64, tpu.core_type = #tpu.core_type<tc>, window_params = [{transform_indices = @transform_0, window_bounds = array<i64: 1, 32, 342>}, {pipeline_mode = #tpu.pipeline_mode<synchronous>, transform_indices = @transform_1, window_bounds = array<i64: 32, 288>}, {pipeline_mode = #tpu.pipeline_mode<synchronous>, transform_indices = @transform_2, window_bounds = array<i64: 32, 1>}, {pipeline_mode = #tpu.pipeline_mode<synchronous>, transform_indices = @transform_3, window_bounds = array<i64: 1, 288>}, {pipeline_mode = #tpu.pipeline_mode<synchronous>, transform_indices = @transform_4, window_bounds = array<i64: 32, 2>}, {pipeline_mode = #tpu.pipeline_mode<synchronous>, transform_indices = @transform_5, window_bounds = array<i64: 1, 2>}, {pipeline_mode = #tpu.pipeline_mode<synchronous>, transform_indices = @transform_6, window_bounds = array<i64: 32, 2>}, {pipeline_mode = #tpu.pipeline_mode<synchronous>, transform_indices = @transform_7, window_bounds = array<i64: 32, 1>}, {transform_indices = @transform_8, window_bounds = array<i64: 2>}, {transform_indices = @transform_9, window_bounds = array<i64: 1, 32, 288>}]} {
    %c0 = arith.constant 0 : index
    %c0_0 = arith.constant 0 : index
    %c0_1 = arith.constant 0 : index
    %0 = vector.load %arg1[%c0, %c0_0, %c0_1] : memref<1x32x342xbf16, #tpu.memory_space<vmem>>, vector<1x32x342xbf16>
    %1 = vector.shape_cast %0 : vector<1x32x342xbf16> to vector<32x342xbf16>
    %2 = vector.extract_strided_slice %1 {offsets = [0, 0], sizes = [32, 288], strides = [1, 1]} : vector<32x342xbf16> to vector<32x288xbf16>
    %3 = vector.extract_strided_slice %1 {offsets = [0, 1], sizes = [32, 288], strides = [1, 1]} : vector<32x342xbf16> to vector<32x288xbf16>
    %4 = vector.extract_strided_slice %1 {offsets = [0, 2], sizes = [32, 288], strides = [1, 1]} : vector<32x342xbf16> to vector<32x288xbf16>
    %5 = vector.extract_strided_slice %1 {offsets = [0, 18], sizes = [32, 288], strides = [1, 1]} : vector<32x342xbf16> to vector<32x288xbf16>
    %6 = vector.extract_strided_slice %1 {offsets = [0, 19], sizes = [32, 288], strides = [1, 1]} : vector<32x342xbf16> to vector<32x288xbf16>
    %7 = vector.extract_strided_slice %1 {offsets = [0, 20], sizes = [32, 288], strides = [1, 1]} : vector<32x342xbf16> to vector<32x288xbf16>
    %8 = vector.extract_strided_slice %1 {offsets = [0, 36], sizes = [32, 288], strides = [1, 1]} : vector<32x342xbf16> to vector<32x288xbf16>
    %9 = vector.extract_strided_slice %1 {offsets = [0, 37], sizes = [32, 288], strides = [1, 1]} : vector<32x342xbf16> to vector<32x288xbf16>
    %10 = vector.extract_strided_slice %1 {offsets = [0, 38], sizes = [32, 288], strides = [1, 1]} : vector<32x342xbf16> to vector<32x288xbf16>
    %11 = tpu.concatenate %2, %3, %4, %5, %6, %7, %8, %9, %10 in 0 : vector<32x288xbf16>, vector<32x288xbf16>, vector<32x288xbf16>, vector<32x288xbf16>, vector<32x288xbf16>, vector<32x288xbf16>, vector<32x288xbf16>, vector<32x288xbf16>, vector<32x288xbf16> -> vector<288x288xbf16>
    %c0_2 = arith.constant 0 : index
    %c0_3 = arith.constant 0 : index
    %12 = vector.load %arg2[%c0_2, %c0_3] : memref<32x288xbf16, #tpu.memory_space<vmem>>, vector<32x288xbf16>
    %cst = arith.constant dense<0.000000e+00> : vector<32x288xf32>
    %13 = tpu.matmul %12, %11, %cst {dimension_numbers = #tpu.dot_dimension_numbers<[1], [0], [0], [1], [0, 0, 1, 1], [], []>} : vector<32x288xbf16>, vector<288x288xbf16>, vector<32x288xf32> -> vector<32x288xf32>
    %c0_4 = arith.constant 0 : index
    %14 = memref.load %arg9[%c0_4] : memref<2xf32, #tpu.memory_space<smem>>
    %c0_5 = arith.constant 0 : index
    %c0_6 = arith.constant 0 : index
    %15 = vector.load %arg3[%c0_5, %c0_6] : memref<32x1xf32, #tpu.memory_space<vmem>>, vector<32x1xf32>
    %16 = vector.broadcast %15 : vector<32x1xf32> to vector<32x288xf32>
    %17 = arith.addf %13, %16 : vector<32x288xf32>
    %cst_7 = arith.constant 0.000000e+00 : f32
    %18 = vector.broadcast %cst_7 : f32 to vector<32x288xf32>
    %19 = arith.cmpf oge, %17, %18 : vector<32x288xf32>
    %20 = vector.broadcast %14 : f32 to vector<32x288xf32>
    %21 = arith.mulf %20, %17 : vector<32x288xf32>
    %22 = arith.select %19, %17, %21 : vector<32x288xi1>, vector<32x288xf32>
    %c0_8 = arith.constant 0 : index
    %c0_9 = arith.constant 0 : index
    %23 = vector.load %arg4[%c0_8, %c0_9] : memref<1x288xf32, #tpu.memory_space<vmem>>, vector<1x288xf32>
    %24 = vector.broadcast %23 : vector<1x288xf32> to vector<32x288xf32>
    %25 = arith.mulf %22, %24 : vector<32x288xf32>
    %cst_10 = arith.constant dense<0.000000e+00> : vector<32xf32>
    %26 = vector.multi_reduction <add>, %25, %cst_10 [1] : vector<32x288xf32> to vector<32xf32>
    %27 = vector.shape_cast %26 : vector<32xf32> to vector<32x1xf32>
    %c1 = arith.constant 1 : index
    %28 = memref.load %arg9[%c1] : memref<2xf32, #tpu.memory_space<smem>>
    %c0_11 = arith.constant 0 : index
    %c0_12 = arith.constant 0 : index
    %29 = vector.load %arg5[%c0_11, %c0_12] : memref<32x2xf32, #tpu.memory_space<vmem>>, vector<32x2xf32>
    %30 = vector.broadcast %27 : vector<32x1xf32> to vector<32x2xf32>
    %31 = arith.mulf %29, %30 : vector<32x2xf32>
    %cst_13 = arith.constant dense<0.000000e+00> : vector<2xf32>
    %32 = vector.multi_reduction <add>, %31, %cst_13 [0] : vector<32x2xf32> to vector<2xf32>
    %33 = vector.shape_cast %32 : vector<2xf32> to vector<1x2xf32>
    %c0_14 = arith.constant 0 : index
    %c0_15 = arith.constant 0 : index
    %34 = vector.load %arg6[%c0_14, %c0_15] : memref<1x2xf32, #tpu.memory_space<vmem>>, vector<1x2xf32>
    %35 = arith.addf %33, %34 : vector<1x2xf32>
    %cst_16 = arith.constant 0.000000e+00 : f32
    %36 = vector.broadcast %cst_16 : f32 to vector<1x2xf32>
    %37 = arith.cmpf oge, %35, %36 : vector<1x2xf32>
    %38 = vector.broadcast %28 : f32 to vector<1x2xf32>
    %39 = arith.mulf %38, %35 : vector<1x2xf32>
    %40 = arith.select %37, %35, %39 : vector<1x2xi1>, vector<1x2xf32>
    %c0_17 = arith.constant 0 : index
    %c0_18 = arith.constant 0 : index
    %41 = vector.load %arg7[%c0_17, %c0_18] : memref<32x2xf32, #tpu.memory_space<vmem>>, vector<32x2xf32>
    %42 = vector.broadcast %40 : vector<1x2xf32> to vector<32x2xf32>
    %43 = arith.mulf %41, %42 : vector<32x2xf32>
    %cst_19 = arith.constant dense<0.000000e+00> : vector<32xf32>
    %44 = vector.multi_reduction <add>, %43, %cst_19 [1] : vector<32x2xf32> to vector<32xf32>
    %45 = vector.shape_cast %44 : vector<32xf32> to vector<32x1xf32>
    %c0_20 = arith.constant 0 : index
    %c0_21 = arith.constant 0 : index
    %46 = vector.load %arg8[%c0_20, %c0_21] : memref<32x1xf32, #tpu.memory_space<vmem>>, vector<32x1xf32>
    %47 = arith.addf %45, %46 : vector<32x1xf32>
    %48 = arith.negf %47 : vector<32x1xf32>
    %49 = math.exp %48 : vector<32x1xf32>
    %cst_22 = arith.constant 1.000000e+00 : f32
    %50 = vector.broadcast %cst_22 : f32 to vector<32x1xf32>
    %51 = arith.addf %50, %49 : vector<32x1xf32>
    %52 = arith.divf %50, %51 : vector<32x1xf32>
    %cst_23 = arith.constant 1.000000e+00 : f32
    %53 = vector.broadcast %cst_23 : f32 to vector<32x1xf32>
    %54 = arith.addf %53, %52 : vector<32x1xf32>
    %55 = vector.broadcast %54 : vector<32x1xf32> to vector<32x288xf32>
    %56 = arith.mulf %22, %55 : vector<32x288xf32>
    %c0_24 = arith.constant 0 : index
    %c0_25 = arith.constant 0 : index
    %c0_26 = arith.constant 0 : index
    %57 = vector.load %arg10[%c0_24, %c0_25, %c0_26] : memref<1x32x288xf32, #tpu.memory_space<vmem>>, vector<1x32x288xf32>
    %58 = vector.shape_cast %57 : vector<1x32x288xf32> to vector<32x288xf32>
    %59 = vector.shape_cast %56 : vector<32x288xf32> to vector<1x32x288xf32>
    tpu.vector_store %arg10[%c0_24, %c0_25, %c0_26], %59 {strides = array<i32>} : memref<1x32x288xf32, #tpu.memory_space<vmem>>, vector<1x32x288xf32>,
    return
  }
  func.func @transform_0(%arg0: i32) -> (i32, i32, i32) {
    %c0_i32 = arith.constant 0 : i32
    %c0_i32_0 = arith.constant 0 : i32
    %c0_i32_1 = arith.constant 0 : i32
    return %arg0, %c0_i32, %c0_i32_0 : i32, i32, i32
  }
  func.func @transform_1(%arg0: i32) -> (i32, i32) {
    %c0_i32 = arith.constant 0 : i32
    %c0_i32_0 = arith.constant 0 : i32
    %c0_i32_1 = arith.constant 0 : i32
    return %c0_i32, %c0_i32_0 : i32, i32
  }
  func.func @transform_2(%arg0: i32) -> (i32, i32) {
    %c0_i32 = arith.constant 0 : i32
    %c0_i32_0 = arith.constant 0 : i32
    %c0_i32_1 = arith.constant 0 : i32
    return %c0_i32, %c0_i32_0 : i32, i32
  }
  func.func @transform_3(%arg0: i32) -> (i32, i32) {
    %c0_i32 = arith.constant 0 : i32
    %c0_i32_0 = arith.constant 0 : i32
    %c0_i32_1 = arith.constant 0 : i32
    return %c0_i32, %c0_i32_0 : i32, i32
  }
  func.func @transform_4(%arg0: i32) -> (i32, i32) {
    %c0_i32 = arith.constant 0 : i32
    %c0_i32_0 = arith.constant 0 : i32
    %c0_i32_1 = arith.constant 0 : i32
    return %c0_i32, %c0_i32_0 : i32, i32
  }
  func.func @transform_5(%arg0: i32) -> (i32, i32) {
    %c0_i32 = arith.constant 0 : i32
    %c0_i32_0 = arith.constant 0 : i32
    %c0_i32_1 = arith.constant 0 : i32
    return %c0_i32, %c0_i32_0 : i32, i32
  }
  func.func @transform_6(%arg0: i32) -> (i32, i32) {
    %c0_i32 = arith.constant 0 : i32
    %c0_i32_0 = arith.constant 0 : i32
    %c0_i32_1 = arith.constant 0 : i32
    return %c0_i32, %c0_i32_0 : i32, i32
  }
  func.func @transform_7(%arg0: i32) -> (i32, i32) {
    %c0_i32 = arith.constant 0 : i32
    %c0_i32_0 = arith.constant 0 : i32
    %c0_i32_1 = arith.constant 0 : i32
    return %c0_i32, %c0_i32_0 : i32, i32
  }
  func.func @transform_8(%arg0: i32) -> i32 {
    %c0_i32 = arith.constant 0 : i32
    %c0_i32_0 = arith.constant 0 : i32
    return %c0_i32 : i32
  }
  func.func @transform_9(%arg0: i32) -> (i32, i32, i32) {
    %c0_i32 = arith.constant 0 : i32
    %c0_i32_0 = arith.constant 0 : i32
    %c0_i32_1 = arith.constant 0 : i32
    return %arg0, %c0_i32, %c0_i32_0 : i32, i32, i32
  }
}

</mosaic_0001>

<llo_original>
// kernel: tpu_custom_call.1
$region0: #{tpu_custom_call.1}
  #allocation0 [shape = 'u32[]', space=smem, size = 0x4, offset = 0x4, fixed_abs, tag = 'smem constant byte address 0x4 - core index']
  #allocation1 [shape = 'u32[72,128]{1,0:T(1,128)}', space=vmem, size = 0x9000, scoped, tag = 'internal scratch']
  %s0 = inlined_call_operand.hbm [shape: bf16[2,32,342], index: 0, kind: input, shape index: {}]
  %s1 = inlined_call_operand.vmem [shape: bf16[32,288], index: 1, kind: input, shape index: {}]
  %s2 = inlined_call_operand.vmem [shape: f32[32,1], index: 2, kind: input, shape index: {}]
  %s3 = inlined_call_operand.vmem [shape: f32[1,288], index: 3, kind: input, shape index: {}]
  %s4 = inlined_call_operand.vmem [shape: f32[32,2], index: 4, kind: input, shape index: {}]
  %s5 = inlined_call_operand.vmem [shape: f32[1,2], index: 5, kind: input, shape index: {}]
  %s6 = inlined_call_operand.vmem [shape: f32[32,2], index: 6, kind: input, shape index: {}]
  %s7 = inlined_call_operand.vmem [shape: f32[32,1], index: 7, kind: input, shape index: {}]
  %s8 = inlined_call_operand.vmem [shape: f32[2], index: 8, kind: input, shape index: {}]
  %s9 = inlined_call_operand.hbm [shape: f32[2,32,288], index: 9, kind: output, shape index: {}]
  %s10 = sld [smem:[#allocation0]]
  $region77: #{tpu_custom_call.1} parent=0
    _
  %s12 = ssub.s32 1, %s10
  %s13 = scalar_select 0, %s12, %s10
  $region1: #{tpu_custom_call.1} parent=0
    #allocation2 [shape = 'u8[49152]{0}', space=vmem, size = 0xc000, scoped, tag = 'input window, operand 0']
    #allocation3 [shape = 's32[2]{0}', space=sflag, size = 0x8, scoped, tag = 'scoped memory for tpu_custom_call.1']
    #allocation4 [shape = 's32[2]{0}', space=sflag, size = 0x8, scoped, tag = 'scoped memory for tpu_custom_call.1']
    #allocation5 [shape = 's32[2]{0}', space=sflag, size = 0x8, scoped, tag = 'scoped memory for tpu_custom_call.1']
    #allocation6 [shape = 'u8[512]{0}', space=smem, size = 0x200, scoped, tag = 'input window, operand 8, single buffered']
    #allocation7 [shape = 'u8[98304]{0}', space=vmem, size = 0x18000, scoped, tag = 'output window, operand 0']
    %14 = vsyncpa [#allocation3], 0
    %s15 = scalar_lea.sflag [#allocation3], 1
    %16 = vsyncpa %s15, 0
    %17 = vsyncpa [#allocation5], 0
    %18 = vsyncpa [#allocation4], 0
    %s19 = scalar_lea.sflag [#allocation4], 1
    %20 = vsyncpa %s19, 0
    loop: start=0, step=1, limit=4
    $region2: #{tpu_custom_call.1} parent=1 // loop_pre_header
      _
    $region3: #{tpu_custom_call.1} parent=1 // loop_header
      %s22 = sphi 0, %s26
      %p23 = scmp.ge.s32.totalorder %s22, 4
      %s32 = sphi 0, %s34
      %s35 = sphi 0, %s32
      %s36 = sphi 0, %s35
      %s52 = sphi 0, %s36
      %s56 = sphi 0, %s56
      %s58 = sphi 0, %s56
      %s59 = sphi 0, %s58
      %s73 = sphi 0, %s59
      %s77 = sphi 0, %s77
      %s79 = sphi 0, %s77
      %s80 = sphi 0, %s79
      %s94 = sphi 0, %s80
      %s98 = sphi 0, %s98
      %s100 = sphi 0, %s98
      %s101 = sphi 0, %s100
      %s115 = sphi 0, %s101
      %s119 = sphi 0, %s119
      %s121 = sphi 0, %s119
      %s122 = sphi 0, %s121
      %s136 = sphi 0, %s122
      %s140 = sphi 0, %s140
      %s142 = sphi 0, %s140
      %s143 = sphi 0, %s142
      %s157 = sphi 0, %s143
      %s161 = sphi 0, %s161
      %s163 = sphi 0, %s161
      %s164 = sphi 0, %s163
      %s178 = sphi 0, %s164
      %s182 = sphi 0, %s182
      %s184 = sphi 0, %s182
      %s185 = sphi 0, %s184
      %s199 = sphi 0, %s185
      %s203 = sphi 0, %s203
      %s205 = sphi 0, %s203
      %s206 = sphi 0, %s205
      %s220 = sphi 0, %s206
      %s226 = sphi 0, %s228
      %s229 = sphi 0, %s226
      %s230 = sphi 0, %s229
      %s246 = sphi 0, %s230
    $region4: #{tpu_custom_call.1} parent=1 // loop_header_branch
      %25 = sbr.rel (%p23) target = $region8
    $region5: #{tpu_custom_call.1} parent=1 // loop_body
      %s27 = ssub.s32 %s22, 1
      %s28 = ssub.s32 %s22, 2
      %s29 = sadd.s32 %s22, 1
      %s30 = ssub.s32 %s22, %s29
      %p31 = scmp.eq.s32.totalorder %s30, 0
      %s33 = sadd.s32 %s32, 1
      %s34 = scalar_select %p31, %s32, %s33
      %p37 = pneg %p31
      %p38 = scmp.eq.s32.totalorder %s22, 1
      %p39 = por %p37, %p38
      %p40 = scmp.ne.s32.totalorder %s32, %s35
      %p41 = scmp.eq.s32.totalorder %s22, 0
      %p42 = por %p40, %p41
      %p43 = scmp.ne.s32.totalorder %s32, %s35
      %p44 = scmp.eq.s32.totalorder %s27, 1
      %p45 = por %p43, %p44
      %p46 = scmp.ne.s32.totalorder %s35, %s36
      %p47 = scmp.eq.s32.totalorder %s27, 0
      %p48 = por %p46, %p47
      %p49 = scmp.ne.s32.totalorder %s35, %s36
      %p50 = scmp.eq.s32.totalorder %s28, 1
      %p51 = por %p49, %p50
      %p53 = scmp.ne.s32.totalorder %s36, %s52
      %p54 = scmp.eq.s32.totalorder %s28, 0
      %p55 = por %p53, %p54
      %s57 = sadd.s32 %s56, 1
      %p60 = scmp.eq.s32.totalorder %s22, 1
      %p61 = scmp.ne.s32.totalorder %s56, %s58
      %p62 = scmp.eq.s32.totalorder %s22, 0
      %p63 = por %p61, %p62
      %p64 = scmp.ne.s32.totalorder %s56, %s58
      %p65 = scmp.eq.s32.totalorder %s27, 1
      %p66 = por %p64, %p65
      %p67 = scmp.ne.s32.totalorder %s58, %s59
      %p68 = scmp.eq.s32.totalorder %s27, 0
      %p69 = por %p67, %p68
      %p70 = scmp.ne.s32.totalorder %s58, %s59
      %p71 = scmp.eq.s32.totalorder %s28, 1
      %p72 = por %p70, %p71
      %p74 = scmp.ne.s32.totalorder %s59, %s73
      %p75 = scmp.eq.s32.totalorder %s28, 0
      %p76 = por %p74, %p75
      %s78 = sadd.s32 %s77, 1
      %p81 = scmp.eq.s32.totalorder %s22, 1
      %p82 = scmp.ne.s32.totalorder %s77, %s79
      %p83 = scmp.eq.s32.totalorder %s22, 0
      %p84 = por %p82, %p83
      %p85 = scmp.ne.s32.totalorder %s77, %s79
      %p86 = scmp.eq.s32.totalorder %s27, 1
      %p87 = por %p85, %p86
      %p88 = scmp.ne.s32.totalorder %s79, %s80
      %p89 = scmp.eq.s32.totalorder %s27, 0
      %p90 = por %p88, %p89
      %p91 = scmp.ne.s32.totalorder %s79, %s80
      %p92 = scmp.eq.s32.totalorder %s28, 1
      %p93 = por %p91, %p92
      %p95 = scmp.ne.s32.totalorder %s80, %s94
      %p96 = scmp.eq.s32.totalorder %s28, 0
      %p97 = por %p95, %p96
      %s99 = sadd.s32 %s98, 1
      %p102 = scmp.eq.s32.totalorder %s22, 1
      %p103 = scmp.ne.s32.totalorder %s98, %s100
      %p104 = scmp.eq.s32.totalorder %s22, 0
      %p105 = por %p103, %p104
      %p106 = scmp.ne.s32.totalorder %s98, %s100
      %p107 = scmp.eq.s32.totalorder %s27, 1
      %p108 = por %p106, %p107
      %p109 = scmp.ne.s32.totalorder %s100, %s101
      %p110 = scmp.eq.s32.totalorder %s27, 0
      %p111 = por %p109, %p110
      %p112 = scmp.ne.s32.totalorder %s100, %s101
      %p113 = scmp.eq.s32.totalorder %s28, 1
      %p114 = por %p112, %p113
      %p116 = scmp.ne.s32.totalorder %s101, %s115
      %p117 = scmp.eq.s32.totalorder %s28, 0
      %p118 = por %p116, %p117
      %s120 = sadd.s32 %s119, 1
      %p123 = scmp.eq.s32.totalorder %s22, 1
      %p124 = scmp.ne.s32.totalorder %s119, %s121
      %p125 = scmp.eq.s32.totalorder %s22, 0
      %p126 = por %p124, %p125
      %p127 = scmp.ne.s32.totalorder %s119, %s121
      %p128 = scmp.eq.s32.totalorder %s27, 1
      %p129 = por %p127, %p128
      %p130 = scmp.ne.s32.totalorder %s121, %s122
      %p131 = scmp.eq.s32.totalorder %s27, 0
      %p132 = por %p130, %p131
      %p133 = scmp.ne.s32.totalorder %s121, %s122
      %p134 = scmp.eq.s32.totalorder %s28, 1
      %p135 = por %p133, %p134
      %p137 = scmp.ne.s32.totalorder %s122, %s136
      %p138 = scmp.eq.s32.totalorder %s28, 0
      %p139 = por %p137, %p138
      %s141 = sadd.s32 %s140, 1
      %p144 = scmp.eq.s32.totalorder %s22, 1
      %p145 = scmp.ne.s32.totalorder %s140, %s142
      %p146 = scmp.eq.s32.totalorder %s22, 0
      %p147 = por %p145, %p146
      %p148 = scmp.ne.s32.totalorder %s140, %s142
      %p149 = scmp.eq.s32.totalorder %s27, 1
      %p150 = por %p148, %p149
      %p151 = scmp.ne.s32.totalorder %s142, %s143
      %p152 = scmp.eq.s32.totalorder %s27, 0
      %p153 = por %p151, %p152
      %p154 = scmp.ne.s32.totalorder %s142, %s143
      %p155 = scmp.eq.s32.totalorder %s28, 1
      %p156 = por %p154, %p155
      %p158 = scmp.ne.s32.totalorder %s143, %s157
      %p159 = scmp.eq.s32.totalorder %s28, 0
      %p160 = por %p158, %p159
      %s162 = sadd.s32 %s161, 1
      %p165 = scmp.eq.s32.totalorder %s22, 1
      %p166 = scmp.ne.s32.totalorder %s161, %s163
      %p167 = scmp.eq.s32.totalorder %s22, 0
      %p168 = por %p166, %p167
      %p169 = scmp.ne.s32.totalorder %s161, %s163
      %p170 = scmp.eq.s32.totalorder %s27, 1
      %p171 = por %p169, %p170
      %p172 = scmp.ne.s32.totalorder %s163, %s164
      %p173 = scmp.eq.s32.totalorder %s27, 0
      %p174 = por %p172, %p173
      %p175 = scmp.ne.s32.totalorder %s163, %s164
      %p176 = scmp.eq.s32.totalorder %s28, 1
      %p177 = por %p175, %p176
      %p179 = scmp.ne.s32.totalorder %s164, %s178
      %p180 = scmp.eq.s32.totalorder %s28, 0
      %p181 = por %p179, %p180
      %s183 = sadd.s32 %s182, 1
      %p186 = scmp.eq.s32.totalorder %s22, 1
      %p187 = scmp.ne.s32.totalorder %s182, %s184
      %p188 = scmp.eq.s32.totalorder %s22, 0
      %p189 = por %p187, %p188
      %p190 = scmp.ne.s32.totalorder %s182, %s184
      %p191 = scmp.eq.s32.totalorder %s27, 1
      %p192 = por %p190, %p191
      %p193 = scmp.ne.s32.totalorder %s184, %s185
      %p194 = scmp.eq.s32.totalorder %s27, 0
      %p195 = por %p193, %p194
      %p196 = scmp.ne.s32.totalorder %s184, %s185
      %p197 = scmp.eq.s32.totalorder %s28, 1
      %p198 = por %p196, %p197
      %p200 = scmp.ne.s32.totalorder %s185, %s199
      %p201 = scmp.eq.s32.totalorder %s28, 0
      %p202 = por %p200, %p201
      %s204 = sadd.s32 %s203, 1
      %p207 = scmp.eq.s32.totalorder %s22, 1
      %p208 = scmp.ne.s32.totalorder %s203, %s205
      %p209 = scmp.eq.s32.totalorder %s22, 0
      %p210 = por %p208, %p209
      %p211 = scmp.ne.s32.totalorder %s203, %s205
      %p212 = scmp.eq.s32.totalorder %s27, 1
      %p213 = por %p211, %p212
      %p214 = scmp.ne.s32.totalorder %s205, %s206
      %p215 = scmp.eq.s32.totalorder %s27, 0
      %p216 = por %p214, %p215
      %p217 = scmp.ne.s32.totalorder %s205, %s206
      %p218 = scmp.eq.s32.totalorder %s28, 1
      %p219 = por %p217, %p218
      %p221 = scmp.ne.s32.totalorder %s206, %s220
      %p222 = scmp.eq.s32.totalorder %s28, 0
      %p223 = por %p221, %p222
      %s224 = ssub.s32 %s22, %s29
      %p225 = scmp.eq.s32.totalorder %s224, 0
      %s227 = sadd.s32 %s226, 1
      %s228 = scalar_select %p225, %s226, %s227
      %p231 = pneg %p225
      %p232 = scmp.eq.s32.totalorder %s22, 1
      %p233 = por %p231, %p232
      %p234 = scmp.ne.s32.totalorder %s226, %s229
      %p235 = scmp.eq.s32.totalorder %s22, 0
      %p236 = por %p234, %p235
      %p237 = scmp.ne.s32.totalorder %s226, %s229
      %p238 = scmp.eq.s32.totalorder %s27, 1
      %p239 = por %p237, %p238
      %p240 = scmp.ne.s32.totalorder %s229, %s230
      %p241 = scmp.eq.s32.totalorder %s27, 0
      %p242 = por %p240, %p241
      %p243 = scmp.ne.s32.totalorder %s229, %s230
      %p244 = scmp.eq.s32.totalorder %s28, 1
      %p245 = por %p243, %p244
      %p247 = scmp.ne.s32.totalorder %s230, %s246
      %p248 = scmp.eq.s32.totalorder %s28, 0
      %p249 = por %p247, %p248
      %p250 = scmp.le.s32.totalorder 1, %s22
      %p251 = scmp.lt.s32.totalorder %s22, 3
      %p252 = pnand %p250, %p251
      %p253 = pneg %p252
      // Predicated region
      $region9: #{tpu_custom_call.1} parent=5 // pred_check
        _
      $region10: #{tpu_custom_call.1} parent=5 // pred_check_branch
        %255 = sbr.rel (%p252) target = $region12
      $region11: #{tpu_custom_call.1} parent=5 // pred_region
        %s256 = ssub.s32 %s22, 1
        // Predicated region
        $region13: #{tpu_custom_call.1} parent=11 // pred_check
          %p257 = pneg %p69
        $region14: #{tpu_custom_call.1} parent=11 // pred_check_branch
          %259 = sbr.rel (%p257) target = $region16
        $region15: #{tpu_custom_call.1} parent=11 // pred_region
          _
        $region16: #{tpu_custom_call.1} parent=11 // pred_fallthru
          _
        // Predicated region
        $region17: #{tpu_custom_call.1} parent=11 // pred_check
          %p260 = pneg %p90
        $region18: #{tpu_custom_call.1} parent=11 // pred_check_branch
          %262 = sbr.rel (%p260) target = $region20
        $region19: #{tpu_custom_call.1} parent=11 // pred_region
          _
        $region20: #{tpu_custom_call.1} parent=11 // pred_fallthru
          _
        // Predicated region
        $region21: #{tpu_custom_call.1} parent=11 // pred_check
          %p263 = pneg %p111
        $region22: #{tpu_custom_call.1} parent=11 // pred_check_branch
          %265 = sbr.rel (%p263) target = $region24
        $region23: #{tpu_custom_call.1} parent=11 // pred_region
          _
        $region24: #{tpu_custom_call.1} parent=11 // pred_fallthru
          _
        // Predicated region
        $region25: #{tpu_custom_call.1} parent=11 // pred_check
          %p266 = pneg %p132
        $region26: #{tpu_custom_call.1} parent=11 // pred_check_branch
          %268 = sbr.rel (%p266) target = $region28
        $region27: #{tpu_custom_call.1} parent=11 // pred_region
          _
        $region28: #{tpu_custom_call.1} parent=11 // pred_fallthru
          _
        // Predicated region
        $region29: #{tpu_custom_call.1} parent=11 // pred_check
          %p269 = pneg %p153
        $region30: #{tpu_custom_call.1} parent=11 // pred_check_branch
          %271 = sbr.rel (%p269) target = $region32
        $region31: #{tpu_custom_call.1} parent=11 // pred_region
          _
        $region32: #{tpu_custom_call.1} parent=11 // pred_fallthru
          _
        // Predicated region
        $region33: #{tpu_custom_call.1} parent=11 // pred_check
          %p272 = pneg %p174
        $region34: #{tpu_custom_call.1} parent=11 // pred_check_branch
          %274 = sbr.rel (%p272) target = $region36
        $region35: #{tpu_custom_call.1} parent=11 // pred_region
          _
        $region36: #{tpu_custom_call.1} parent=11 // pred_fallthru
          _
        // Predicated region
        $region37: #{tpu_custom_call.1} parent=11 // pred_check
          %p275 = pneg %p195
        $region38: #{tpu_custom_call.1} parent=11 // pred_check_branch
          %277 = sbr.rel (%p275) target = $region40
        $region39: #{tpu_custom_call.1} parent=11 // pred_region
          _
        $region40: #{tpu_custom_call.1} parent=11 // pred_fallthru
          _
        // Predicated region
        $region41: #{tpu_custom_call.1} parent=11 // pred_check
          %p278 = pneg %p216
        $region42: #{tpu_custom_call.1} parent=11 // pred_check_branch
          %280 = sbr.rel (%p278) target = $region44
        $region43: #{tpu_custom_call.1} parent=11 // pred_region
          %282 = vsyncadd [#allocation5], 0
          %s284 = sshll.u32 %s8, 4
          %s285 = int_to_ptr.vmem [resolvable:$true] %s284
          %287 = dma.vmem_to_smem %s285, 16, [#allocation6], [#allocation5]
        $region44: #{tpu_custom_call.1} parent=11 // pred_fallthru
          _
      $region12: #{tpu_custom_call.1} parent=5 // pred_fallthru
        _
      %p288 = scmp.lt.s32.totalorder %s22, 2
      // Predicated region
      $region45: #{tpu_custom_call.1} parent=5 // pred_check
        %p289 = pneg %p288
      $region46: #{tpu_custom_call.1} parent=5 // pred_check_branch
        %291 = sbr.rel (%p289) target = $region48
      $region47: #{tpu_custom_call.1} parent=5 // pred_region
        // Predicated region
        $region49: #{tpu_custom_call.1} parent=47 // pred_check
          %p292 = pneg %p42
        $region50: #{tpu_custom_call.1} parent=47 // pred_check_branch
          %294 = sbr.rel (%p292) target = $region52
        $region51: #{tpu_custom_call.1} parent=47 // pred_region
          %s295 = sand.u32 %s32, 1
          %s296 = scalar_lea.sflag [#allocation3], %s295
          %s297 = sand.u32 %s32, 1
          %s298 = smul.addr %s297, 48
          %s299 = scalar_lea.vmem [#allocation2], %s298
          %301 = vsyncadd %s296, 0
          %s302 = smul.addr %s22, 12
          %s303 = smul.addr %s302, 4
          %s304 = scalar_lea.hbm %s0, %s303
          %s305 = sshll.u32 %s304, 4
          %s306 = int_to_ptr.hbm [resolvable:$true] %s305
          %s307 = sshll.u32 %s299, 4
          %s308 = int_to_ptr.vmem [resolvable:$true] %s307
          %313 = dma.hbm_to_vmem [thread:$0]  %s306, 768, %s308, %s296, 192, 192, 12
        $region52: #{tpu_custom_call.1} parent=47 // pred_fallthru
          _
      $region48: #{tpu_custom_call.1} parent=5 // pred_fallthru
        _
      %p314 = scmp.le.s32.totalorder 1, %s22
      %p315 = scmp.lt.s32.totalorder %s22, 3
      %p316 = pnand %p314, %p315
      %p317 = pneg %p316
      // Predicated region
      $region53: #{tpu_custom_call.1} parent=5 // pred_check
        _
      $region54: #{tpu_custom_call.1} parent=5 // pred_check_branch
        %319 = sbr.rel (%p316) target = $region56
      $region55: #{tpu_custom_call.1} parent=5 // pred_region
        %s320 = ssub.s32 %s22, 1
        %s321 = sand.u32 %s35, 1
        %s322 = scalar_lea.sflag [#allocation3], %s321
        %s323 = sand.u32 %s35, 1
        %s324 = smul.addr %s323, 48
        %s325 = scalar_lea.vmem [#allocation2], %s324
        // Predicated region
        $region57: #{tpu_custom_call.1} parent=55 // pred_check
          %p326 = pneg %p48
        $region58: #{tpu_custom_call.1} parent=55 // pred_check_branch
          %328 = sbr.rel (%p326) target = $region60
        $region59: #{tpu_custom_call.1} parent=55 // pred_region
          %330 = dma.done %s322, 768
        $region60: #{tpu_custom_call.1} parent=55 // pred_fallthru
          _
        // Predicated region
        $region61: #{tpu_custom_call.1} parent=55 // pred_check
          %p331 = pneg %p216
        $region62: #{tpu_custom_call.1} parent=55 // pred_check_branch
          %333 = sbr.rel (%p331) target = $region64
        $region63: #{tpu_custom_call.1} parent=55 // pred_region
          %335 = dma.done [#allocation5], 16
        $region64: #{tpu_custom_call.1} parent=55 // pred_fallthru
          _
        %336 = sfence
        %s337 = sand.u32 %s35, 1
        %s338 = scalar_lea.sflag [#allocation3], %s337
        %s339 = sand.u32 %s35, 1
        %s340 = smul.addr %s339, 48
        %s341 = scalar_lea.vmem [#allocation2], %s340
        %p342 = pneg %p48
        %p343 = pneg %p45
        %p344 = pneg %p69
        %p345 = pneg %p66
        %p346 = pneg %p90
        %p347 = pneg %p87
        %p348 = pneg %p111
        %p349 = pneg %p108
        %p350 = pneg %p132
        %p351 = pneg %p129
        %p352 = pneg %p153
        %p353 = pneg %p150
        %p354 = pneg %p174
        %p355 = pneg %p171
        %p356 = pneg %p195
        %p357 = pneg %p192
        %p358 = pneg %p216
        %p359 = pneg %p213
        %p360 = pneg %p242
        %p361 = pneg %p239
        %s362 = sand.u32 %s229, 1
        %s363 = scalar_lea.sflag [#allocation4], %s362
        %s364 = sand.u32 %s229, 1
        %s365 = smul.addr %s364, 96
        %s366 = scalar_lea.vmem [#allocation7], %s365
        %v368 = vld [vmem:[%s325] sm:$0xff]
        %v369 = vld [vmem:[%s325 + $0x8] sm:$0xf]
        %v370 = vld [vmem:[%s325 + $0xc] sm:$0xff]
        %v371 = vld [vmem:[%s325 + $0x14] sm:$0xf]
        %v372 = vld [vmem:[%s325 + $0x18] sm:$0xff]
        %v373 = vld [vmem:[%s325 + $0x20] sm:$0xf]
        %v374 = vld [vmem:[%s325 + $0x24] sm:$0xff]
        %v375 = vld [vmem:[%s325 + $0x2c] sm:$0xf]
        %v384 = vunpack.c.l.b16 %v368
        %v385 = vunpack.c.h.b16 %v368
        %v386 = vunpack.c.l.b16 %v369
        %v387 = vunpack.c.l.b16 %v370
        %v388 = vunpack.c.h.b16 %v370
        %v389 = vunpack.c.l.b16 %v371
        %v390 = vunpack.c.l.b16 %v372
        %v391 = vunpack.c.h.b16 %v372
        %v392 = vunpack.c.l.b16 %v373
        %v393 = vunpack.c.l.b16 %v374
        %v394 = vunpack.c.h.b16 %v374
        %v395 = vunpack.c.l.b16 %v375
        %v396 = vpack.c.b16 %v387, %v384
        %v397 = vpack.c.b16 %v388, %v385
        %v398 = vpack.c.b16 %v389, %v386
        %v399 = vpack.c.b16 %v393, %v390
        %v400 = vpack.c.b16 %v394, %v391
        %v401 = vpack.c.b16 %v395, %v392
        %408 = vrot.lane.b32.xlu0 %v396, 127
        %v409 = vpop.permute.xlu0 %408
        %410 = vrot.lane.b32.xlu0 %v397, 127
        %v411 = vpop.permute.xlu0 %410
        %412 = vrot.lane.b32.xlu0 %v398, 127
        %v413 = vpop.permute.xlu0 %412
        %414 = vrot.lane.b32.xlu0 %v399, 127
        %v415 = vpop.permute.xlu0 %414
        %416 = vrot.lane.b32.xlu0 %v400, 127
        %v417 = vpop.permute.xlu0 %416
        %418 = vrot.lane.b32.xlu0 %v401, 127
        %v419 = vpop.permute.xlu0 %418
        %vm420 = vcmask 1039360
        %v421 = vsel %vm420, %v409, %v411
        %v422 = vsel %vm420, %v411, %v413
        %v423 = vsel %vm420, %v415, %v417
        %v424 = vsel %vm420, %v417, %v419
        %431 = vrot.lane.b32.xlu0 %v396, 126
        %v432 = vpop.permute.xlu0 %431
        %433 = vrot.lane.b32.xlu0 %v397, 126
        %v434 = vpop.permute.xlu0 %433
        %435 = vrot.lane.b32.xlu0 %v398, 126
        %v436 = vpop.permute.xlu0 %435
        %437 = vrot.lane.b32.xlu0 %v399, 126
        %v438 = vpop.permute.xlu0 %437
        %439 = vrot.lane.b32.xlu0 %v400, 126
        %v440 = vpop.permute.xlu0 %439
        %441 = vrot.lane.b32.xlu0 %v401, 126
        %v442 = vpop.permute.xlu0 %441
        %vm443 = vcmask 1031168
        %v444 = vsel %vm443, %v432, %v434
        %v445 = vsel %vm443, %v434, %v436
        %v446 = vsel %vm443, %v438, %v440
        %v447 = vsel %vm443, %v440, %v442
        %454 = vrot.lane.b32.xlu0 %v396, 110
        %v455 = vpop.permute.xlu0 %454
        %456 = vrot.lane.b32.xlu0 %v397, 110
        %v457 = vpop.permute.xlu0 %456
        %458 = vrot.lane.b32.xlu0 %v398, 110
        %v459 = vpop.permute.xlu0 %458
        %460 = vrot.lane.b32.xlu0 %v399, 110
        %v461 = vpop.permute.xlu0 %460
        %462 = vrot.lane.b32.xlu0 %v400, 110
        %v463 = vpop.permute.xlu0 %462
        %464 = vrot.lane.b32.xlu0 %v401, 110
        %v465 = vpop.permute.xlu0 %464
        %vm466 = vcmask 900096
        %v467 = vsel %vm466, %v455, %v457
        %v468 = vsel %vm466, %v457, %v459
        %v469 = vsel %vm466, %v461, %v463
        %v470 = vsel %vm466, %v463, %v465
        %477 = vrot.lane.b32.xlu0 %v396, 109
        %v478 = vpop.permute.xlu0 %477
        %479 = vrot.lane.b32.xlu0 %v397, 109
        %v480 = vpop.permute.xlu0 %479
        %481 = vrot.lane.b32.xlu0 %v398, 109
        %v482 = vpop.permute.xlu0 %481
        %483 = vrot.lane.b32.xlu0 %v399, 109
        %v484 = vpop.permute.xlu0 %483
        %485 = vrot.lane.b32.xlu0 %v400, 109
        %v486 = vpop.permute.xlu0 %485
        %487 = vrot.lane.b32.xlu0 %v401, 109
        %v488 = vpop.permute.xlu0 %487
        %vm489 = vcmask 891904
        %v490 = vsel %vm489, %v478, %v480
        %v491 = vsel %vm489, %v480, %v482
        %v492 = vsel %vm489, %v484, %v486
        %v493 = vsel %vm489, %v486, %v488
        %500 = vrot.lane.b32.xlu0 %v396, 108
        %v501 = vpop.permute.xlu0 %500
        %502 = vrot.lane.b32.xlu0 %v397, 108
        %v503 = vpop.permute.xlu0 %502
        %504 = vrot.lane.b32.xlu0 %v398, 108
        %v505 = vpop.permute.xlu0 %504
        %506 = vrot.lane.b32.xlu0 %v399, 108
        %v507 = vpop.permute.xlu0 %506
        %508 = vrot.lane.b32.xlu0 %v400, 108
        %v509 = vpop.permute.xlu0 %508
        %510 = vrot.lane.b32.xlu0 %v401, 108
        %v511 = vpop.permute.xlu0 %510
        %vm512 = vcmask 883712
        %v513 = vsel %vm512, %v501, %v503
        %v514 = vsel %vm512, %v503, %v505
        %v515 = vsel %vm512, %v507, %v509
        %v516 = vsel %vm512, %v509, %v511
        %523 = vrot.lane.b32.xlu0 %v396, 92
        %v524 = vpop.permute.xlu0 %523
        %525 = vrot.lane.b32.xlu0 %v397, 92
        %v526 = vpop.permute.xlu0 %525
        %527 = vrot.lane.b32.xlu0 %v398, 92
        %v528 = vpop.permute.xlu0 %527
        %529 = vrot.lane.b32.xlu0 %v399, 92
        %v530 = vpop.permute.xlu0 %529
        %531 = vrot.lane.b32.xlu0 %v400, 92
        %v532 = vpop.permute.xlu0 %531
        %533 = vrot.lane.b32.xlu0 %v401, 92
        %v534 = vpop.permute.xlu0 %533
        %vm535 = vcmask 752640
        %v536 = vsel %vm535, %v524, %v526
        %v537 = vsel %vm535, %v526, %v528
        %v538 = vsel %vm535, %v530, %v532
        %v539 = vsel %vm535, %v532, %v534
        %546 = vrot.lane.b32.xlu0 %v396, 91
        %v547 = vpop.permute.xlu0 %546
        %548 = vrot.lane.b32.xlu0 %v397, 91
        %v549 = vpop.permute.xlu0 %548
        %550 = vrot.lane.b32.xlu0 %v398, 91
        %v551 = vpop.permute.xlu0 %550
        %552 = vrot.lane.b32.xlu0 %v399, 91
        %v553 = vpop.permute.xlu0 %552
        %554 = vrot.lane.b32.xlu0 %v400, 91
        %v555 = vpop.permute.xlu0 %554
        %556 = vrot.lane.b32.xlu0 %v401, 91
        %v557 = vpop.permute.xlu0 %556
        %vm558 = vcmask 744448
        %v559 = vsel %vm558, %v547, %v549
        %v560 = vsel %vm558, %v549, %v551
        %v561 = vsel %vm558, %v553, %v555
        %v562 = vsel %vm558, %v555, %v557
        %569 = vrot.lane.b32.xlu0 %v396, 90
        %v570 = vpop.permute.xlu0 %569
        %571 = vrot.lane.b32.xlu0 %v397, 90
        %v572 = vpop.permute.xlu0 %571
        %573 = vrot.lane.b32.xlu0 %v398, 90
        %v574 = vpop.permute.xlu0 %573
        %575 = vrot.lane.b32.xlu0 %v399, 90
        %v576 = vpop.permute.xlu0 %575
        %577 = vrot.lane.b32.xlu0 %v400, 90
        %v578 = vpop.permute.xlu0 %577
        %579 = vrot.lane.b32.xlu0 %v401, 90
        %v580 = vpop.permute.xlu0 %579
        %vm581 = vcmask 736256
        %v582 = vsel %vm581, %v570, %v572
        %v583 = vsel %vm581, %v572, %v574
        %v584 = vsel %vm581, %v576, %v578
        %v585 = vsel %vm581, %v578, %v580
        %v592 = vld [vmem:[%s1] sm:$0xff]
        %v593 = vld [vmem:[%s1 + $0x8] sm:$0xf]
        %v594 = vld [vmem:[%s1 + $0xc] sm:$0xff]
        %v595 = vld [vmem:[%s1 + $0x14] sm:$0xf]
        %v596 = vld [vmem:[%s1 + $0x18] sm:$0xff]
        %v597 = vld [vmem:[%s1 + $0x20] sm:$0xf]
        %v598 = vld [vmem:[%s1 + $0x24] sm:$0xff]
        %v599 = vld [vmem:[%s1 + $0x2c] sm:$0xf]
        %s600 = sld [smem:[#allocation6]]
        %v601 = vld [vmem:[%s2] sm:$0xff]
        %v602 = vld [vmem:[%s2 + $0x8] sm:$0xff]
        %v603 = vld [vmem:[%s2 + $0x10] sm:$0xff]
        %v604 = vld [vmem:[%s2 + $0x18] sm:$0xff]
        %606 = vset.pattern.permute.xlu0 0
        %607 = vperm.xlu0 %606, %v601
        %v608 = vpop.permute.xlu0 %607
        %611 = vset.pattern.permute.xlu0 0
        %612 = vperm.xlu0 %611, %v602
        %v613 = vpop.permute.xlu0 %612
        %616 = vset.pattern.permute.xlu0 0
        %617 = vperm.xlu0 %616, %v603
        %v618 = vpop.permute.xlu0 %617
        %621 = vset.pattern.permute.xlu0 0
        %622 = vperm.xlu0 %621, %v604
        %v623 = vpop.permute.xlu0 %622
        %v633 = vunpack.c.l.b16 %v592
        %v634 = vunpack.c.h.b16 %v592
        %v635 = vunpack.c.l.b16 %v593
        %v636 = vunpack.c.l.b16 %v594
        %v637 = vunpack.c.h.b16 %v594
        %v638 = vunpack.c.l.b16 %v595
        %v639 = vunpack.c.l.b16 %v596
        %v640 = vunpack.c.h.b16 %v596
        %v641 = vunpack.c.l.b16 %v597
        %v642 = vunpack.c.l.b16 %v598
        %v643 = vunpack.c.h.b16 %v598
        %v644 = vunpack.c.l.b16 %v599
        %v645 = vpack.c.b16 %v636, %v633
        %v646 = vpack.c.b16 %v637, %v634
        %v647 = vpack.c.b16 %v638, %v635
        %v648 = vpack.c.b16 %v642, %v639
        %v649 = vpack.c.b16 %v643, %v640
        %v650 = vpack.c.b16 %v644, %v641
        %vm655 = vcmask 261120
        %v657 = vsel %vm655, %v647, 0
        %v660 = vsel %vm655, %v650, 0
        %662 = vmatpush.bf16.msra.mxu0 %v469
        %663 = vmatpush.bf16.msra.mxu0 %v467
        %664 = vmatpush.bf16.msra.mxu0 %v446
        %665 = vmatpush.bf16.msra.mxu0 %v444
        %666 = vmatpush.bf16.msra.mxu0 %v423
        %667 = vmatpush.bf16.msra.mxu0 %v421
        %668 = vmatpush.bf16.msra.mxu0 %v399
        %669 = vmatpush.bf16.msra.mxu0 %v396
        %670 = vmatmul.bf16.gmra.mxu0 %v645
        %v671 = vpop.f32.mrf.mxu0
        %v672 = vadd.f32 %v608, %v671
        %v673 = vpop.f32.mrf.mxu0
        %v674 = vadd.f32 %v613, %v673
        %675 = vmatmul.bf16.gmra.mxu0 %v648
        %v676 = vpop.f32.mrf.mxu0
        %v677 = vadd.f32 %v618, %v676
        %v678 = vpop.f32.mrf.mxu0
        %v679 = vadd.f32 %v623, %v678
        %680 = vdwg.mxu0
        %681 = vmatpush.bf16.msra.mxu0 %v561
        %682 = vmatpush.bf16.msra.mxu0 %v559
        %683 = vmatpush.bf16.msra.mxu0 %v538
        %684 = vmatpush.bf16.msra.mxu0 %v536
        %685 = vmatpush.bf16.msra.mxu0 %v515
        %686 = vmatpush.bf16.msra.mxu0 %v513
        %687 = vmatpush.bf16.msra.mxu0 %v492
        %688 = vmatpush.bf16.msra.mxu0 %v490
        %689 = vmatmul.bf16.gmra.mxu0 %v646
        %v690 = vpop.f32.mrf.mxu0
        %v691 = vadd.f32 %v672, %v690
        %v692 = vpop.f32.mrf.mxu0
        %v693 = vadd.f32 %v674, %v692
        %694 = vmatmul.bf16.gmra.mxu0 %v649
        %v695 = vpop.f32.mrf.mxu0
        %v696 = vadd.f32 %v677, %v695
        %v697 = vpop.f32.mrf.mxu0
        %v698 = vadd.f32 %v679, %v697
        %699 = vdwg.mxu0
        %700 = vmatpush.bf16.msra.mxu0 0
        %701 = vmatpush.bf16.msra.mxu0 0
        %702 = vmatpush.bf16.msra.mxu0 0
        %703 = vmatpush.bf16.msra.mxu0 0
        %704 = vmatpush.bf16.msra.mxu0 0
        %705 = vmatpush.bf16.msra.mxu0 0
        %706 = vmatpush.bf16.msra.mxu0 %v584
        %707 = vmatpush.bf16.msra.mxu0 %v582
        %708 = vmatmul.bf16.gmra.mxu0 %v657
        %v709 = vpop.f32.mrf.mxu0
        %v710 = vadd.f32 %v691, %v709
        %v711 = vpop.f32.mrf.mxu0
        %v712 = vadd.f32 %v693, %v711
        %713 = vmatmul.bf16.gmra.mxu0 %v660
        %v714 = vpop.f32.mrf.mxu0
        %v715 = vadd.f32 %v696, %v714
        %v716 = vpop.f32.mrf.mxu0
        %v717 = vadd.f32 %v698, %v716
        %718 = vdwg.mxu0
        %719 = vmatpush.bf16.msra.mxu0 %v470
        %720 = vmatpush.bf16.msra.mxu0 %v468
        %721 = vmatpush.bf16.msra.mxu0 %v447
        %722 = vmatpush.bf16.msra.mxu0 %v445
        %723 = vmatpush.bf16.msra.mxu0 %v424
        %724 = vmatpush.bf16.msra.mxu0 %v422
        %725 = vmatpush.bf16.msra.mxu0 %v400
        %726 = vmatpush.bf16.msra.mxu0 %v397
        %727 = vmatmul.bf16.gmra.mxu0 %v645
        %v728 = vpop.f32.mrf.mxu0
        %v729 = vadd.f32 %v608, %v728
        %v730 = vpop.f32.mrf.mxu0
        %v731 = vadd.f32 %v613, %v730
        %732 = vmatmul.bf16.gmra.mxu0 %v648
        %v733 = vpop.f32.mrf.mxu0
        %v734 = vadd.f32 %v618, %v733
        %v735 = vpop.f32.mrf.mxu0
        %v736 = vadd.f32 %v623, %v735
        %737 = vdwg.mxu0
        %738 = vmatpush.bf16.msra.mxu0 %v562
        %739 = vmatpush.bf16.msra.mxu0 %v560
        %740 = vmatpush.bf16.msra.mxu0 %v539
        %741 = vmatpush.bf16.msra.mxu0 %v537
        %742 = vmatpush.bf16.msra.mxu0 %v516
        %743 = vmatpush.bf16.msra.mxu0 %v514
        %744 = vmatpush.bf16.msra.mxu0 %v493
        %745 = vmatpush.bf16.msra.mxu0 %v491
        %746 = vmatmul.bf16.gmra.mxu0 %v646
        %v747 = vpop.f32.mrf.mxu0
        %v748 = vadd.f32 %v729, %v747
        %v749 = vpop.f32.mrf.mxu0
        %v750 = vadd.f32 %v731, %v749
        %751 = vmatmul.bf16.gmra.mxu0 %v649
        %v752 = vpop.f32.mrf.mxu0
        %v753 = vadd.f32 %v734, %v752
        %v754 = vpop.f32.mrf.mxu0
        %v755 = vadd.f32 %v736, %v754
        %756 = vdwg.mxu0
        %757 = vmatpush.bf16.msra.mxu0 0
        %758 = vmatpush.bf16.msra.mxu0 0
        %759 = vmatpush.bf16.msra.mxu0 0
        %760 = vmatpush.bf16.msra.mxu0 0
        %761 = vmatpush.bf16.msra.mxu0 0
        %762 = vmatpush.bf16.msra.mxu0 0
        %763 = vmatpush.bf16.msra.mxu0 %v585
        %764 = vmatpush.bf16.msra.mxu0 %v583
        %765 = vmatmul.bf16.gmra.mxu0 %v657
        %v766 = vpop.f32.mrf.mxu0
        %v767 = vadd.f32 %v748, %v766
        %v768 = vpop.f32.mrf.mxu0
        %v769 = vadd.f32 %v750, %v768
        %770 = vmatmul.bf16.gmra.mxu0 %v660
        %v771 = vpop.f32.mrf.mxu0
        %v772 = vadd.f32 %v753, %v771
        %v773 = vpop.f32.mrf.mxu0
        %v774 = vadd.f32 %v755, %v773
        %775 = vdwg.mxu0
        %776 = vmatpush.bf16.msra.mxu0 %v465
        %777 = vmatpush.bf16.msra.mxu0 %v459
        %778 = vmatpush.bf16.msra.mxu0 %v442
        %779 = vmatpush.bf16.msra.mxu0 %v436
        %780 = vmatpush.bf16.msra.mxu0 %v419
        %781 = vmatpush.bf16.msra.mxu0 %v413
        %782 = vmatpush.bf16.msra.mxu0 %v401
        %783 = vmatpush.bf16.msra.mxu0 %v398
        %784 = vmatmul.bf16.gmra.mxu0 %v645
        %v785 = vpop.f32.mrf.mxu0
        %v786 = vadd.f32 %v608, %v785
        %v787 = vpop.f32.mrf.mxu0
        %v788 = vadd.f32 %v613, %v787
        %789 = vmatmul.bf16.gmra.mxu0 %v648
        %v790 = vpop.f32.mrf.mxu0
        %v791 = vadd.f32 %v618, %v790
        %v792 = vpop.f32.mrf.mxu0
        %v793 = vadd.f32 %v623, %v792
        %794 = vdwg.mxu0
        %795 = vmatpush.bf16.msra.mxu0 %v557
        %796 = vmatpush.bf16.msra.mxu0 %v551
        %797 = vmatpush.bf16.msra.mxu0 %v534
        %798 = vmatpush.bf16.msra.mxu0 %v528
        %799 = vmatpush.bf16.msra.mxu0 %v511
        %800 = vmatpush.bf16.msra.mxu0 %v505
        %801 = vmatpush.bf16.msra.mxu0 %v488
        %802 = vmatpush.bf16.msra.mxu0 %v482
        %803 = vmatmul.bf16.gmra.mxu0 %v646
        %v804 = vpop.f32.mrf.mxu0
        %v805 = vadd.f32 %v786, %v804
        %v806 = vpop.f32.mrf.mxu0
        %v807 = vadd.f32 %v788, %v806
        %808 = vmatmul.bf16.gmra.mxu0 %v649
        %v809 = vpop.f32.mrf.mxu0
        %v810 = vadd.f32 %v791, %v809
        %v811 = vpop.f32.mrf.mxu0
        %v812 = vadd.f32 %v793, %v811
        %813 = vdwg.mxu0
        %814 = vmatpush.bf16.msra.mxu0 0
        %815 = vmatpush.bf16.msra.mxu0 0
        %816 = vmatpush.bf16.msra.mxu0 0
        %817 = vmatpush.bf16.msra.mxu0 0
        %818 = vmatpush.bf16.msra.mxu0 0
        %819 = vmatpush.bf16.msra.mxu0 0
        %820 = vmatpush.bf16.msra.mxu0 %v580
        %821 = vmatpush.bf16.msra.mxu0 %v574
        %822 = vmatmul.bf16.gmra.mxu0 %v657
        %v823 = vpop.f32.mrf.mxu0
        %v824 = vadd.f32 %v805, %v823
        %v825 = vpop.f32.mrf.mxu0
        %v826 = vadd.f32 %v807, %v825
        %827 = vmatmul.bf16.gmra.mxu0 %v660
        %v828 = vpop.f32.mrf.mxu0
        %v829 = vadd.f32 %v810, %v828
        %v830 = vpop.f32.mrf.mxu0
        %v831 = vadd.f32 %v812, %v830
        %832 = vdwg.mxu0
        %vm833 = vcmp.ge.f32.partialorder %v710, 0.0
        %vm834 = vcmp.ge.f32.partialorder %v767, 0.0
        %vm835 = vcmp.ge.f32.partialorder %v824, 0.0
        %vm836 = vcmp.ge.f32.partialorder %v712, 0.0
        %vm837 = vcmp.ge.f32.partialorder %v769, 0.0
        %vm838 = vcmp.ge.f32.partialorder %v826, 0.0
        %vm839 = vcmp.ge.f32.partialorder %v715, 0.0
        %vm840 = vcmp.ge.f32.partialorder %v772, 0.0
        %vm841 = vcmp.ge.f32.partialorder %v829, 0.0
        %vm842 = vcmp.ge.f32.partialorder %v717, 0.0
        %vm843 = vcmp.ge.f32.partialorder %v774, 0.0
        %vm844 = vcmp.ge.f32.partialorder %v831, 0.0
        %v845 = vstv %s600
        %v846 = vmul.f32 %v845, %v710
        %v847 = vmul.f32 %v845, %v767
        %v848 = vmul.f32 %v845, %v824
        %v849 = vmul.f32 %v845, %v712
        %v850 = vmul.f32 %v845, %v769
        %v851 = vmul.f32 %v845, %v826
        %v852 = vmul.f32 %v845, %v715
        %v853 = vmul.f32 %v845, %v772
        %v854 = vmul.f32 %v845, %v829
        %v855 = vmul.f32 %v845, %v717
        %v856 = vmul.f32 %v845, %v774
        %v857 = vmul.f32 %v845, %v831
        %v858 = vsel %vm833, %v710, %v846
        %v859 = vsel %vm834, %v767, %v847
        %v860 = vsel %vm835, %v824, %v848
        %v861 = vsel %vm836, %v712, %v849
        %v862 = vsel %vm837, %v769, %v850
        %v863 = vsel %vm838, %v826, %v851
        %v864 = vsel %vm839, %v715, %v852
        %v865 = vsel %vm840, %v772, %v853
        %v866 = vsel %vm841, %v829, %v854
        %v867 = vsel %vm842, %v717, %v855
        %v868 = vsel %vm843, %v774, %v856
        %v869 = vsel %vm844, %v831, %v857
        %v870 = vld [vmem:[%s3] sm:$0x7]
        %v872 = vperm.slane %v870, 0
        %v873 = vperm.slane %v870, 1
        %v874 = vperm.slane %v870, 2
        %v878 = vmul.f32 %v858, %v872
        %v879 = vmul.f32 %v859, %v873
        %v880 = vmul.f32 %v860, %v874
        %v881 = vmul.f32 %v861, %v872
        %v882 = vmul.f32 %v862, %v873
        %v883 = vmul.f32 %v863, %v874
        %v884 = vmul.f32 %v864, %v872
        %v885 = vmul.f32 %v865, %v873
        %v886 = vmul.f32 %v866, %v874
        %v887 = vmul.f32 %v867, %v872
        %v888 = vmul.f32 %v868, %v873
        %v889 = vmul.f32 %v869, %v874
        %v890 = vadd.f32 %v878, %v879
        %v891 = vsel %vm655, %v880, 0.0
        %v892 = vadd.f32 %v890, %v891
        %893 = vadd.xlane.f32.xlu0 %v892
        %v894 = vpop.xlane.xlu0 %893
        %v895 = vadd.f32 %v881, %v882
        %v896 = vsel %vm655, %v883, 0.0
        %v897 = vadd.f32 %v895, %v896
        %898 = vadd.xlane.f32.xlu0 %v897
        %v899 = vpop.xlane.xlu0 %898
        %v900 = vadd.f32 %v884, %v885
        %v901 = vsel %vm655, %v886, 0.0
        %v902 = vadd.f32 %v900, %v901
        %903 = vadd.xlane.f32.xlu0 %v902
        %v904 = vpop.xlane.xlu0 %903
        %v905 = vadd.f32 %v887, %v888
        %v906 = vsel %vm655, %v889, 0.0
        %v907 = vadd.f32 %v905, %v906
        %908 = vadd.xlane.f32.xlu0 %v907
        %v909 = vpop.xlane.xlu0 %908
        %s910 = sld [smem:[#allocation6 + $0x1]]
        %v911 = vld [vmem:[%s4] sm:$0xff]
        %v912 = vld [vmem:[%s4 + $0x8] sm:$0xff]
        %v913 = vld [vmem:[%s4 + $0x10] sm:$0xff]
        %v914 = vld [vmem:[%s4 + $0x18] sm:$0xff]
        %v915 = vmul.f32 %v911, %v894
        %v916 = vmul.f32 %v912, %v899
        %v917 = vmul.f32 %v913, %v904
        %v918 = vmul.f32 %v914, %v909
        %vm919 = vcmask 15360
        %v920 = vsel %vm919, %v915, 0.0
        %v921 = vsel %vm919, %v916, 0.0
        %v922 = vadd.f32 %v920, %v921
        %v923 = vsel %vm919, %v917, 0.0
        %v924 = vadd.f32 %v922, %v923
        %v925 = vsel %vm919, %v918, 0.0
        %v926 = vadd.f32 %v924, %v925
        %v927 = vrot.slane %v926, 4
        %v928 = vadd.f32 %v926, %v927
        %v929 = vrot.slane %v928, 2
        %v930 = vadd.f32 %v928, %v929
        %v931 = vrot.slane %v930, 1
        %v932 = vadd.f32 %v930, %v931
        %v933 = vld [vmem:[%s5] sm:$0x1]
        %v934 = vadd.f32 %v932, %v933
        %vm935 = vcmp.ge.f32.partialorder %v934, 0.0
        %v936 = vstv %s910
        %v937 = vmul.f32 %v936, %v934
        %v938 = vsel %vm935, %v934, %v937
        %v939 = vld [vmem:[%s6] sm:$0xff]
        %v940 = vld [vmem:[%s6 + $0x8] sm:$0xff]
        %v941 = vld [vmem:[%s6 + $0x10] sm:$0xff]
        %v942 = vld [vmem:[%s6 + $0x18] sm:$0xff]
        %v943 = vperm.slane %v938, 0
        %v944 = vmul.f32 %v939, %v943
        %v945 = vmul.f32 %v940, %v943
        %v946 = vmul.f32 %v941, %v943
        %v947 = vmul.f32 %v942, %v943
        %v948 = vsel %vm919, %v944, 0.0
        %949 = vadd.xlane.f32.xlu0 %v948
        %v950 = vpop.xlane.xlu0 %949
        %v951 = vsel %vm919, %v945, 0.0
        %952 = vadd.xlane.f32.xlu0 %v951
        %v953 = vpop.xlane.xlu0 %952
        %v954 = vsel %vm919, %v946, 0.0
        %955 = vadd.xlane.f32.xlu0 %v954
        %v956 = vpop.xlane.xlu0 %955
        %v957 = vsel %vm919, %v947, 0.0
        %958 = vadd.xlane.f32.xlu0 %v957
        %v959 = vpop.xlane.xlu0 %958
        %v960 = vld [vmem:[%s7] sm:$0xff]
        %v961 = vld [vmem:[%s7 + $0x8] sm:$0xff]
        %v962 = vld [vmem:[%s7 + $0x10] sm:$0xff]
        %v963 = vld [vmem:[%s7 + $0x18] sm:$0xff]
        %v964 = vadd.f32 %v950, %v960
        %v965 = vadd.f32 %v953, %v961
        %v966 = vadd.f32 %v956, %v962
        %v967 = vadd.f32 %v959, %v963
        %v968 = vxor.u32 %v964, 2147483648
        %v969 = vxor.u32 %v965, 2147483648
        %v970 = vxor.u32 %v966, 2147483648
        %v971 = vxor.u32 %v967, 2147483648
        %v972 = vmul.f32 %v968, 1.442695
        %v973 = vpow.pop %v972
        %v974 = vmul.f32 %v969, 1.442695
        %v975 = vpow.pop %v974
        %v976 = vmul.f32 %v970, 1.442695
        %v977 = vpow.pop %v976
        %v978 = vmul.f32 %v971, 1.442695
        %v979 = vpow.pop %v978
        %v980 = vadd.f32 %v973, 1.0
        %v981 = vadd.f32 %v975, 1.0
        %v982 = vadd.f32 %v977, 1.0
        %v983 = vadd.f32 %v979, 1.0
        %v984 = vrcp.pop %v980
        %v985 = vmul.f32 %v980, %v984
        %v986 = vsub.f32 1.0, %v985
        %v987 = vmul.f32 %v984, %v986
        %v988 = vadd.f32 %v984, %v987
        %vm989 = vweird.f32 %v980
        %vm990 = vweird.f32 %v984
        %vm991 = vmor %vm989, %vm990
        %v992 = vsel %vm991, %v984, %v988
        %v993 = vand.u32 2147483647, %v980
        %vm994 = vcmp.eq.f32.partialorder %v993, 8.507059e+37
        %v995 = vand.u32 %v980, 2147483648
        %v996 = vor.u32 1.1754944e-38, %v995
        %v997 = vsel %vm994, %v996, %v992
        %v998 = vmul.f32 1.0, %v997
        %v999 = vrcp.pop %v981
        %v1000 = vmul.f32 %v981, %v999
        %v1001 = vsub.f32 1.0, %v1000
        %v1002 = vmul.f32 %v999, %v1001
        %v1003 = vadd.f32 %v999, %v1002
        %vm1004 = vweird.f32 %v981
        %vm1005 = vweird.f32 %v999
        %vm1006 = vmor %vm1004, %vm1005
        %v1007 = vsel %vm1006, %v999, %v1003
        %v1008 = vand.u32 2147483647, %v981
        %vm1009 = vcmp.eq.f32.partialorder %v1008, 8.507059e+37
        %v1010 = vand.u32 %v981, 2147483648
        %v1011 = vor.u32 1.1754944e-38, %v1010
        %v1012 = vsel %vm1009, %v1011, %v1007
        %v1013 = vmul.f32 1.0, %v1012
        %v1014 = vrcp.pop %v982
        %v1015 = vmul.f32 %v982, %v1014
        %v1016 = vsub.f32 1.0, %v1015
        %v1017 = vmul.f32 %v1014, %v1016
        %v1018 = vadd.f32 %v1014, %v1017
        %vm1019 = vweird.f32 %v982
        %vm1020 = vweird.f32 %v1014
        %vm1021 = vmor %vm1019, %vm1020
        %v1022 = vsel %vm1021, %v1014, %v1018
        %v1023 = vand.u32 2147483647, %v982
        %vm1024 = vcmp.eq.f32.partialorder %v1023, 8.507059e+37
        %v1025 = vand.u32 %v982, 2147483648
        %v1026 = vor.u32 1.1754944e-38, %v1025
        %v1027 = vsel %vm1024, %v1026, %v1022
        %v1028 = vmul.f32 1.0, %v1027
        %v1029 = vrcp.pop %v983
        %v1030 = vmul.f32 %v983, %v1029
        %v1031 = vsub.f32 1.0, %v1030
        %v1032 = vmul.f32 %v1029, %v1031
        %v1033 = vadd.f32 %v1029, %v1032
        %vm1034 = vweird.f32 %v983
        %vm1035 = vweird.f32 %v1029
        %vm1036 = vmor %vm1034, %vm1035
        %v1037 = vsel %vm1036, %v1029, %v1033
        %v1038 = vand.u32 2147483647, %v983
        %vm1039 = vcmp.eq.f32.partialorder %v1038, 8.507059e+37
        %v1040 = vand.u32 %v983, 2147483648
        %v1041 = vor.u32 1.1754944e-38, %v1040
        %v1042 = vsel %vm1039, %v1041, %v1037
        %v1043 = vmul.f32 1.0, %v1042
        %v1044 = vadd.f32 %v998, 1.0
        %v1045 = vadd.f32 %v1013, 1.0
        %v1046 = vadd.f32 %v1028, 1.0
        %v1047 = vadd.f32 %v1043, 1.0
        %1049 = vset.pattern.permute.xlu0 0
        %1050 = vperm.xlu0 %1049, %v1044
        %v1051 = vpop.permute.xlu0 %1050
        %1054 = vset.pattern.permute.xlu0 0
        %1055 = vperm.xlu0 %1054, %v1045
        %v1056 = vpop.permute.xlu0 %1055
        %1059 = vset.pattern.permute.xlu0 0
        %1060 = vperm.xlu0 %1059, %v1046
        %v1061 = vpop.permute.xlu0 %1060
        %1064 = vset.pattern.permute.xlu0 0
        %1065 = vperm.xlu0 %1064, %v1047
        %v1066 = vpop.permute.xlu0 %1065
        %v1068 = vmul.f32 %v858, %v1051
        %v1069 = vmul.f32 %v859, %v1051
        %v1070 = vmul.f32 %v860, %v1051
        %v1071 = vmul.f32 %v861, %v1056
        %v1072 = vmul.f32 %v862, %v1056
        %v1073 = vmul.f32 %v863, %v1056
        %v1074 = vmul.f32 %v864, %v1061
        %v1075 = vmul.f32 %v865, %v1061
        %v1076 = vmul.f32 %v866, %v1061
        %v1077 = vmul.f32 %v867, %v1066
        %v1078 = vmul.f32 %v868, %v1066
        %v1079 = vmul.f32 %v869, %v1066
        %1080 = vst [vmem:[%s366] sm:$0xff] %v1068
        %1081 = vst [vmem:[%s366 + $0x8] sm:$0xff] %v1069
        %1082 = vst.msk [vmem:[%s366 + $0x10] sm:$0xff] %vm655, %v1070
        %1083 = vst [vmem:[%s366 + $0x18] sm:$0xff] %v1071
        %1084 = vst [vmem:[%s366 + $0x20] sm:$0xff] %v1072
        %1085 = vst.msk [vmem:[%s366 + $0x28] sm:$0xff] %vm655, %v1073
        %1086 = vst [vmem:[%s366 + $0x30] sm:$0xff] %v1074
        %1087 = vst [vmem:[%s366 + $0x38] sm:$0xff] %v1075
        %1088 = vst.msk [vmem:[%s366 + $0x40] sm:$0xff] %vm655, %v1076
        %1089 = vst [vmem:[%s366 + $0x48] sm:$0xff] %v1077
        %1090 = vst [vmem:[%s366 + $0x50] sm:$0xff] %v1078
        %1091 = vst.msk [vmem:[%s366 + $0x58] sm:$0xff] %vm655, %v1079
        %s1092 = sand.u32 %s229, 1
        %s1093 = scalar_lea.sflag [#allocation4], %s1092
        %s1094 = sand.u32 %s229, 1
        %s1095 = smul.addr %s1094, 96
        %s1096 = scalar_lea.vmem [#allocation7], %s1095
        // Predicated region
        $region65: #{tpu_custom_call.1} parent=55 // pred_check
          %p1097 = pneg %p239
        $region66: #{tpu_custom_call.1} parent=55 // pred_check_branch
          %1099 = sbr.rel (%p1097) target = $region68
        $region67: #{tpu_custom_call.1} parent=55 // pred_region
          %1101 = vsyncadd %s1093, 0
          %s1102 = smul.addr %s27, 12
          %s1103 = smul.addr %s1102, 8
          %s1104 = scalar_lea.hbm %s9, %s1103
          %s1105 = sshll.u32 %s1096, 4
          %s1106 = int_to_ptr.vmem [resolvable:$true] %s1105
          %s1107 = sshll.u32 %s1104, 4
          %s1108 = int_to_ptr.hbm [resolvable:$true] %s1107
          %1113 = dma.vmem_to_hbm [thread:$0]  %s1106, 1536, %s1108, %s1093, 384, 384, 24
        $region68: #{tpu_custom_call.1} parent=55 // pred_fallthru
          _
      $region56: #{tpu_custom_call.1} parent=5 // pred_fallthru
        _
      %p1114 = scmp.le.s32.totalorder 2, %s22
      // Predicated region
      $region69: #{tpu_custom_call.1} parent=5 // pred_check
        %p1115 = pneg %p1114
      $region70: #{tpu_custom_call.1} parent=5 // pred_check_branch
        %1117 = sbr.rel (%p1115) target = $region72
      $region71: #{tpu_custom_call.1} parent=5 // pred_region
        %s1118 = ssub.s32 %s22, 2
        // Predicated region
        $region73: #{tpu_custom_call.1} parent=71 // pred_check
          %p1119 = pneg %p245
        $region74: #{tpu_custom_call.1} parent=71 // pred_check_branch
          %1121 = sbr.rel (%p1119) target = $region76
        $region75: #{tpu_custom_call.1} parent=71 // pred_region
          %s1122 = sand.u32 %s230, 1
          %s1123 = scalar_lea.sflag [#allocation4], %s1122
          %s1124 = sand.u32 %s230, 1
          %s1125 = smul.addr %s1124, 96
          %s1126 = scalar_lea.vmem [#allocation7], %s1125
          %1128 = dma.done %s1123, 1536
        $region76: #{tpu_custom_call.1} parent=71 // pred_fallthru
          _
      $region72: #{tpu_custom_call.1} parent=5 // pred_fallthru
        _
    $region6: #{tpu_custom_call.1} parent=1 // loop_footer
      %s26 = sadd.s32 1, %s22
    $region7: #{tpu_custom_call.1} parent=1 // loop_footer_branch
      %21 = sbr.rel target = $region3
    $region8: #{tpu_custom_call.1} parent=1 // loop_exit
      _
    %1129 = vsyncpa [#allocation3], 1
    %s1130 = scalar_lea.sflag [#allocation3], 1
    %1131 = vsyncpa %s1130, 1
    %1132 = vsyncpa [#allocation4], 1
    %s1133 = scalar_lea.sflag [#allocation4], 1
    %1134 = vsyncpa %s1133, 1
    %1135 = vsyncpa [#allocation5], 1
    %s1136 = scalar_lea.sflag [#allocation5], 1
    %1137 = vsyncpa %s1136, 1

</llo_original>
